<compile_context>
chip_gen: v7x
topology: tpu7x:2x2x1
jax: 0.10.0
libtpu: 0.0.40
codegen_flags: <defaults>
</compile_context>

<pallas_src>
import jax
import jax.numpy as jnp
from jax.experimental import pallas as pl
from jax.experimental.pallas import tpu as pltpu


def _elu_plus_one_kernel(x_ref, o_ref):
    """Element-wise ELU(x) + 1 (alpha = 1) on a VMEM tile.

    elu(x) + 1 == x + 1   (x > 0)
               == exp(x)  (x <= 0)
    The exp goes to the EUP slot; the add/select stay on the VPU, so the
    kernel is purely HBM-bandwidth bound.
    """
    x = x_ref[...]
    o_ref[...] = jnp.where(x > 0, x + 1.0, jnp.exp(x)).astype(o_ref.dtype)


def activation_feature_map(x, *, target_block_bytes=2 * 1024 * 1024):
    """Apply the ActivationFunctionFeatureMap (elu(x) + 1) via a Pallas kernel.

    x: any-shaped float array (canonically (batch, seq, heads, query_dims)).
    Returns an array of the same shape/dtype.
    """
    orig_shape = x.shape
    total = x.size
    if total == 0:
        return x
    if x.ndim == 0:  # degenerate scalar input
        return activation_feature_map(x.reshape(1, 1),
                                      target_block_bytes=target_block_bytes
                                      ).reshape(())

    # ---- Lane-dense 2-D view: pick the widest lane axis (multiple of 128)
    # that divides the total element count; otherwise fall back to the
    # original feature axis (a full-extent last dim is always a legal block).
    lane = None
    for cand in (4096, 2048, 1024, 512, 256, 128):
        if total % cand == 0:
            lane = cand
            break
    if lane is None:
        lane = orig_shape[-1]
    rows = total // lane
    x2d = x.reshape(rows, lane)

    # ---- Block size targeting ~target_block_bytes (multiple of 8 sublanes).
    itemsize = x.dtype.itemsize
    block_rows = max(8, (target_block_bytes // (lane * itemsize)) // 8 * 8)
    if block_rows >= rows:
        block_rows = rows  # single whole-array block (grid of 1)
    grid = (pl.cdiv(rows, block_rows),)  # ragged last block is fine (elementwise)

    out2d = pl.pallas_call(
        _elu_plus_one_kernel,
        out_shape=jax.ShapeDtypeStruct((rows, lane), x.dtype),
        grid=grid,
        in_specs=[pl.BlockSpec((block_rows, lane), lambda i: (i, 0))],
        out_specs=pl.BlockSpec((block_rows, lane), lambda i: (i, 0)),
        compiler_params=pltpu.CompilerParams(
            dimension_semantics=("parallel",)),
    )(x2d)

    return out2d.reshape(orig_shape)


if __name__ == "__main__":
    key = jax.random.PRNGKey(0)

    # Canonical feature-map usage on attention queries/keys:
    # (batch=2, seq=8, heads=4, query_dims=32) -> lane-dense view (2, 1024).
    x = jax.random.normal(key, (2, 8, 4, 32), dtype=jnp.float32)
    out = activation_feature_map(x)
    jax.block_until_ready(out)

    ref = jax.nn.elu(x) + 1.0
    assert out.shape == x.shape
    assert out.dtype == x.dtype
    assert jnp.allclose(out, ref, atol=1e-6, rtol=1e-6)

    # Second case exercising a multi-block grid with a ragged trailing block
    # (rows=25 at lane=512, block_rows=8 -> grid of 4, last block partial).
    x2 = jax.random.normal(jax.random.PRNGKey(1), (2, 50, 4, 32),
                           dtype=jnp.float32)
    out2 = activation_feature_map(x2, target_block_bytes=8 * 512 * 4)
    jax.block_until_ready(out2)
    ref2 = jax.nn.elu(x2) + 1.0
    assert jnp.allclose(out2, ref2, atol=1e-6, rtol=1e-6)

    # Third case: odd feature dim (lane falls back to full last dim) and bf16.
    x3 = jax.random.normal(jax.random.PRNGKey(2), (3, 7, 2, 33),
                           dtype=jnp.bfloat16)
    out3 = activation_feature_map(x3)
    jax.block_until_ready(out3)
    ref3 = (jax.nn.elu(x3.astype(jnp.float32)) + 1.0).astype(jnp.bfloat16)
    assert out3.shape == x3.shape and out3.dtype == x3.dtype
    assert jnp.allclose(out3.astype(jnp.float32), ref3.astype(jnp.float32),
                        atol=2e-2, rtol=2e-2)

    print("KERNEL_OK")
</pallas_src>

<mosaic_0001>
module attributes {stable_mosaic.version = 11 : i64} {
  func.func @_elu_plus_one_kernel(%arg0: i32, %arg1: memref<1x2048xf32, #tpu.memory_space<vmem>>, %arg2: memref<1x2048xf32, #tpu.memory_space<vmem>>) attributes {dimension_semantics = [#tpu.dimension_semantics<parallel>], iteration_bounds = array<i64: 1>, scalar_prefetch = 0 : i64, scratch_operands = 0 : i64, tpu.core_type = #tpu.core_type<tc>, window_params = [{transform_indices = @transform_0, window_bounds = array<i64: 1, 2048>}, {transform_indices = @transform_1, window_bounds = array<i64: 1, 2048>}]} {
    %c0 = arith.constant 0 : index
    %c0_0 = arith.constant 0 : index
    %0 = vector.load %arg1[%c0, %c0_0] : memref<1x2048xf32, #tpu.memory_space<vmem>>, vector<1x2048xf32>
    %cst = arith.constant 0.000000e+00 : f32
    %1 = vector.broadcast %cst : f32 to vector<1x2048xf32>
    %2 = arith.cmpf ogt, %0, %1 : vector<1x2048xf32>
    %cst_1 = arith.constant 1.000000e+00 : f32
    %3 = vector.broadcast %cst_1 : f32 to vector<1x2048xf32>
    %4 = arith.addf %0, %3 : vector<1x2048xf32>
    %5 = math.exp %0 : vector<1x2048xf32>
    %6 = arith.select %2, %4, %5 : vector<1x2048xi1>, vector<1x2048xf32>
    %c0_2 = arith.constant 0 : index
    %c0_3 = arith.constant 0 : index
    %7 = vector.load %arg2[%c0_2, %c0_3] : memref<1x2048xf32, #tpu.memory_space<vmem>>, vector<1x2048xf32>
    tpu.vector_store %arg2[%c0_2, %c0_3], %6 {strides = array<i32>} : memref<1x2048xf32, #tpu.memory_space<vmem>>, vector<1x2048xf32>,
    return
  }
  func.func @transform_0(%arg0: i32) -> (i32, i32) {
    %c0_i32 = arith.constant 0 : i32
    %c0_i32_0 = arith.constant 0 : i32
    return %arg0, %c0_i32 : i32, i32
  }
  func.func @transform_1(%arg0: i32) -> (i32, i32) {
    %c0_i32 = arith.constant 0 : i32
    %c0_i32_0 = arith.constant 0 : i32
    return %arg0, %c0_i32 : i32, i32
  }
}

</mosaic_0001>

<llo_original>
// kernel: tpu_custom_call.1
$region0: #{tpu_custom_call.1}
  #allocation0 [shape = 'u32[]', space=smem, size = 0x4, offset = 0x4, fixed_abs, tag = 'smem constant byte address 0x4 - core index']
  #allocation1 [shape = 'u32[144,128]{1,0:T(1,128)}', space=vmem, size = 0x12000, scoped, tag = 'internal scratch']
  %s0 = inlined_call_operand.hbm [shape: f32[1,2048], index: 0, kind: input, shape index: {}]
  %s1 = inlined_call_operand.hbm [shape: f32[1,2048], index: 1, kind: output, shape index: {}]
  %s2 = sld [smem:[#allocation0]]
  $region18: #{tpu_custom_call.1} parent=0
    _
  %s4 = ssub.s32 1, %s2
  %s5 = scalar_select 0, %s4, %s2
  $region1: #{tpu_custom_call.1} parent=0
    #allocation2 [shape = 'u8[8192]{0}', space=vmem, size = 0x2000, scoped, tag = 'input window, operand 0, single buffered']
    #allocation3 [shape = 's32[1]{0}', space=sflag, size = 0x4, scoped, tag = 'scoped memory for tpu_custom_call.1']
    #allocation4 [shape = 's32[1]{0}', space=sflag, size = 0x4, scoped, tag = 'scoped memory for tpu_custom_call.1']
    #allocation5 [shape = 'u8[8192]{0}', space=vmem, size = 0x2000, scoped, tag = 'output window, operand 0, single buffered']
    %6 = vsyncpa [#allocation3], 0
    %7 = vsyncpa [#allocation4], 0
    // Predicated region
    $region2: #{tpu_custom_call.1} parent=1 // pred_check
      _
    $region3: #{tpu_custom_call.1} parent=1 // pred_check_branch
      %9 = sbr.rel (0) target = $region5
    $region4: #{tpu_custom_call.1} parent=1 // pred_region
      %s11 = ssub.s32 256, 256
      %12 = vsyncadd [#allocation3], %s11
      %s14 = sshll.u32 [#allocation2], 4
      %s15 = int_to_ptr.vmem [resolvable:$true] %s14
      %17 = dma.hbm_to_vmem [thread:$0]  %s0, 256, %s15, [#allocation3]
    $region5: #{tpu_custom_call.1} parent=1 // pred_fallthru
      _
    // Predicated region
    $region6: #{tpu_custom_call.1} parent=1 // pred_check
      _
    $region7: #{tpu_custom_call.1} parent=1 // pred_check_branch
      %19 = sbr.rel (0) target = $region9
    $region8: #{tpu_custom_call.1} parent=1 // pred_region
      %20 = dma.done [#allocation3], 256
    $region9: #{tpu_custom_call.1} parent=1 // pred_fallthru
      _
    %v21 = vld [vmem:[#allocation2] sm:$0xff]
    %v22 = vld [vmem:[#allocation2 + $0x8] sm:$0xff]
    %vm23 = vcmp.gt.f32.partialorder %v21, 0.0
    %vm24 = vcmp.gt.f32.partialorder %v22, 0.0
    %v25 = vadd.f32 %v21, 1.0
    %v26 = vadd.f32 %v22, 1.0
    %v27 = vmul.f32 %v21, 1.442695
    %v28 = vpow.pop %v27
    %v29 = vmul.f32 %v22, 1.442695
    %v30 = vpow.pop %v29
    %v31 = vsel %vm23, %v25, %v28
    %v32 = vsel %vm24, %v26, %v30
    %33 = vst [vmem:[#allocation5] sm:$0xff] %v31
    %34 = vst [vmem:[#allocation5 + $0x8] sm:$0xff] %v32
    // Predicated region
    $region10: #{tpu_custom_call.1} parent=1 // pred_check
      _
    $region11: #{tpu_custom_call.1} parent=1 // pred_check_branch
      %36 = sbr.rel (0) target = $region13
    $region12: #{tpu_custom_call.1} parent=1 // pred_region
      %s38 = ssub.s32 256, 256
      %39 = vsyncadd [#allocation4], %s38
      %s41 = sshll.u32 [#allocation5], 4
      %s42 = int_to_ptr.vmem [resolvable:$true] %s41
      %44 = dma.vmem_to_hbm [thread:$0]  %s42, 256, %s1, [#allocation4]
    $region13: #{tpu_custom_call.1} parent=1 // pred_fallthru
      _
    // Predicated region
    $region14: #{tpu_custom_call.1} parent=1 // pred_check
      _
    $region15: #{tpu_custom_call.1} parent=1 // pred_check_branch
      %46 = sbr.rel (0) target = $region17
    $region16: #{tpu_custom_call.1} parent=1 // pred_region
      %47 = dma.done [#allocation4], 256
    $region17: #{tpu_custom_call.1} parent=1 // pred_fallthru
      _
    %48 = vsyncpa [#allocation3], 1
    %49 = vsyncpa [#allocation4], 1

</llo_original>
